<compile_context>
chip_gen: v7x
topology: tpu7x:2x2x1
jax: 0.10.0
libtpu: 0.0.40
codegen_flags: <defaults>
</compile_context>

<pallas_src>
import jax
import jax.numpy as jnp
import numpy as np
from jax.experimental import pallas as pl
from jax.experimental.pallas import tpu as pltpu


# ---------------------------------------------------------------------------
# In-kernel math helpers (f32).
# ---------------------------------------------------------------------------
def _layer_norm(h, w, b, eps=1e-5):
    # PyTorch nn.LayerNorm: biased variance, eps inside rsqrt.
    mu = jnp.mean(h, axis=-1, keepdims=True)
    var = jnp.mean(jnp.square(h - mu), axis=-1, keepdims=True)
    return (h - mu) * jax.lax.rsqrt(var + eps) * w + b


def _gelu_exact(x):
    # PyTorch nn.GELU() default: exact erf-based GELU.
    return 0.5 * x * (1.0 + jax.lax.erf(x * np.float32(1.0 / np.sqrt(2.0))))


# ---------------------------------------------------------------------------
# Pass 1: LN1 + fused QKV projection (once per token tile), head-major output.
# ---------------------------------------------------------------------------
def qkv_proj_kernel(x_ref, ln1w_ref, ln1b_ref, wqkv_ref, bqkv_ref,
                    q_ref, k_ref, v_ref):
    H = q_ref.shape[1]
    Dh = q_ref.shape[3]
    E = H * Dh

    x = x_ref[0]                                                 # (T, E) f32
    h = _layer_norm(x, ln1w_ref[...], ln1b_ref[...])
    hb = h.astype(jnp.bfloat16)
    # Single lane-dense (T, E) x (E, 3E) matmul; scale already folded into Wq.
    qkv = jnp.dot(hb, wqkv_ref[...],
                  preferred_element_type=jnp.float32) + bqkv_ref[...]  # (T, 3E)

    # Write head-major (H, T, Dh) bf16 via static per-head lane slices.
    for out_ref, base in ((q_ref, 0), (k_ref, E), (v_ref, 2 * E)):
        for hh in range(H):
            out_ref[0, hh] = qkv[:, base + hh * Dh: base + (hh + 1) * Dh].astype(
                out_ref.dtype)


# ---------------------------------------------------------------------------
# Pass 2: flash attention + out-proj + residual + MLP + residual.
# ---------------------------------------------------------------------------
def flash_block_kernel(x_ref, q_ref, k_ref, v_ref,
                       ln2w_ref, ln2b_ref, wo_ref, bo_ref,
                       fc1w_ref, fc1b_ref, fc2w_ref, fc2b_ref,
                       o_ref,
                       m_sc, l_sc, acc_sc):
    ki = pl.program_id(2)
    nk = pl.num_programs(2)
    H = acc_sc.shape[0]

    # ----- init online-softmax state for this query tile.
    @pl.when(ki == 0)
    def _init():
        m_sc[...] = jnp.full_like(m_sc, -jnp.inf)
        l_sc[...] = jnp.zeros_like(l_sc)
        acc_sc[...] = jnp.zeros_like(acc_sc)

    # ----- every step: QK^T + online softmax update + PV (all precomputed bf16).
    q = q_ref[0]                                                 # (H, TQ, Dh) bf16
    k = k_ref[0]                                                 # (H, TK, Dh) bf16
    v = v_ref[0]                                                 # (H, TK, Dh) bf16

    s = jnp.einsum("hqd,hkd->hqk", q, k,
                   preferred_element_type=jnp.float32)           # (H, TQ, TK) f32

    m_prev = m_sc[...]                                           # (H, TQ)
    m_new = jnp.maximum(m_prev, jnp.max(s, axis=-1))
    alpha = jnp.exp(m_prev - m_new)                              # (H, TQ)
    p = jnp.exp(s - m_new[:, :, None])                           # (H, TQ, TK)
    l_sc[...] = alpha * l_sc[...] + jnp.sum(p, axis=-1)
    acc_sc[...] = alpha[:, :, None] * acc_sc[...] + jnp.einsum(
        "hqk,hkd->hqd", p.astype(jnp.bfloat16), v,
        preferred_element_type=jnp.float32)
    m_sc[...] = m_new

    # ----- finalize: out-proj (single E-deep matmul) + residual + fused MLP.
    @pl.when(ki == nk - 1)
    def _finalize():
        inv_l = pl.reciprocal(l_sc[...], approx=False)           # exact, EUP
        ctx = acc_sc[...] * inv_l[:, :, None]                    # (H, TQ, Dh) f32
        # Concatenate heads along lanes -> (TQ, E); one lane-dense out-proj matmul.
        ctx_flat = jnp.concatenate([ctx[hh] for hh in range(H)], axis=-1)
        attn = jnp.dot(ctx_flat.astype(jnp.bfloat16), wo_ref[...],
                       preferred_element_type=jnp.float32) + bo_ref[...]
        x1 = x_ref[0] + attn                                     # (TQ, E) f32

        h2 = _layer_norm(x1, ln2w_ref[...], ln2b_ref[...])
        m1 = jnp.dot(h2.astype(jnp.bfloat16), fc1w_ref[...],
                     preferred_element_type=jnp.float32) + fc1b_ref[...]
        m1 = _gelu_exact(m1)
        m2 = jnp.dot(m1.astype(jnp.bfloat16), fc2w_ref[...],
                     preferred_element_type=jnp.float32) + fc2b_ref[...]
        o_ref[0] = (x1 + m2).astype(o_ref.dtype)


# ---------------------------------------------------------------------------
# Wrapper: parameter plumbing + the two pallas_calls.
# ---------------------------------------------------------------------------
def block_forward(x_sbe, params, num_heads, *, q_tile=None, kv_tile=None,
                  proj_tile=None):
    """x_sbe: (S, B, E) float32 (PyTorch nn.MultiheadAttention layout)."""
    S, B, E = x_sbe.shape
    assert E % num_heads == 0
    Dh = E // num_heads
    HID = params["fc1_w"].shape[0]

    if q_tile is None:
        q_tile = min(S, 128)
    if kv_tile is None:
        # TK=256 fills the 256-wide MXU on v6e/v7x; use 128 on v5e.
        kv_tile = 256 if S % 256 == 0 else min(S, 128)
    if proj_tile is None:
        proj_tile = q_tile
    assert S % q_tile == 0 and S % kv_tile == 0 and S % proj_tile == 0

    x = jnp.transpose(x_sbe, (1, 0, 2)).astype(jnp.float32)     # (B, S, E)

    bf16, f32 = jnp.bfloat16, jnp.float32
    scale = np.float32(1.0 / np.sqrt(Dh))

    qkv_w = params["qkv_w"]                                     # (3E, E)
    qkv_b = params["qkv_b"]                                     # (3E,)
    # Fused QKV weight, laid out (E_in, 3E_out), bf16; 1/sqrt(Dh) folded into Q.
    wqkv = jnp.concatenate([(qkv_w[:E] * scale).T,
                            qkv_w[E:2 * E].T,
                            qkv_w[2 * E:].T], axis=1).astype(bf16)     # (E, 3E)
    bqkv = jnp.concatenate([qkv_b[:E] * scale,
                            qkv_b[E:2 * E],
                            qkv_b[2 * E:]]).reshape(1, 3 * E).astype(f32)
    # Output projection in flat (E, E) layout (heads concatenated along K).
    wo = params["out_w"].T.astype(bf16)                         # (E, E)
    bo = params["out_b"].reshape(1, E).astype(f32)
    # MLP weights pre-transposed to (in, out), bf16.
    fc1w = params["fc1_w"].T.astype(bf16)                       # (E, HID)
    fc1b = params["fc1_b"].reshape(1, HID).astype(f32)
    fc2w = params["fc2_w"].T.astype(bf16)                       # (HID, E)
    fc2b = params["fc2_b"].reshape(1, E).astype(f32)
    ln1w = params["ln1_w"].reshape(1, E).astype(f32)
    ln1b = params["ln1_b"].reshape(1, E).astype(f32)
    ln2w = params["ln2_w"].reshape(1, E).astype(f32)
    ln2b = params["ln2_b"].reshape(1, E).astype(f32)

    # ------------------ pass 1: LN1 + QKV projection ------------------
    def const2(a):
        nd = a.ndim
        return pl.BlockSpec(a.shape, lambda b, si, _n=nd: (0,) * _n)

    T = proj_tile
    q_hm, k_hm, v_hm = pl.pallas_call(
        qkv_proj_kernel,
        grid=(B, S // T),
        in_specs=[pl.BlockSpec((1, T, E), lambda b, si: (b, si, 0)),
                  const2(ln1w), const2(ln1b), const2(wqkv), const2(bqkv)],
        out_specs=[pl.BlockSpec((1, num_heads, T, Dh),
                                lambda b, si: (b, 0, si, 0))] * 3,
        out_shape=[jax.ShapeDtypeStruct((B, num_heads, S, Dh), bf16)] * 3,
        compiler_params=pltpu.CompilerParams(
            dimension_semantics=("parallel", "parallel"),
            vmem_limit_bytes=48 * 1024 * 1024),
    )(x, ln1w, ln1b, wqkv, bqkv)

    # ------------------ pass 2: flash attention + MLP ------------------
    def const3(a):
        nd = a.ndim
        return pl.BlockSpec(a.shape, lambda b, qi, ki, _n=nd: (0,) * _n)

    consts = (ln2w, ln2b, wo, bo, fc1w, fc1b, fc2w, fc2b)
    grid = (B, S // q_tile, S // kv_tile)

    out = pl.pallas_call(
        flash_block_kernel,
        grid=grid,
        in_specs=[
            pl.BlockSpec((1, q_tile, E), lambda b, qi, ki: (b, qi, 0)),      # x (residual)
            pl.BlockSpec((1, num_heads, q_tile, Dh),
                         lambda b, qi, ki: (b, 0, qi, 0)),                   # Q
            pl.BlockSpec((1, num_heads, kv_tile, Dh),
                         lambda b, qi, ki: (b, 0, ki, 0)),                   # K
            pl.BlockSpec((1, num_heads, kv_tile, Dh),
                         lambda b, qi, ki: (b, 0, ki, 0)),                   # V
        ] + [const3(a) for a in consts],
        out_specs=pl.BlockSpec((1, q_tile, E), lambda b, qi, ki: (b, qi, 0)),
        out_shape=jax.ShapeDtypeStruct((B, S, E), jnp.float32),
        scratch_shapes=[
            pltpu.VMEM((num_heads, q_tile), jnp.float32),        # running max (lane-dense)
            pltpu.VMEM((num_heads, q_tile), jnp.float32),        # running sum (lane-dense)
            pltpu.VMEM((num_heads, q_tile, Dh), jnp.float32),    # ctx accumulator
        ],
        compiler_params=pltpu.CompilerParams(
            dimension_semantics=("parallel", "parallel", "arbitrary"),
            vmem_limit_bytes=48 * 1024 * 1024,      # fits v7x's 64 MiB VMEM
        ),
    )(x, q_hm, k_hm, v_hm, *consts)
    return jnp.transpose(out, (1, 0, 2))  # back to (S, B, E)


# ---------------------------------------------------------------------------
# Pure-JAX f32 reference (same math) for a sanity check.
# ---------------------------------------------------------------------------
def block_reference(x_sbe, params, num_heads):
    S, B, E = x_sbe.shape
    Dh = E // num_heads
    x = jnp.transpose(x_sbe, (1, 0, 2))  # (B, S, E)

    def ln(h, w, b, eps=1e-5):
        mu = jnp.mean(h, axis=-1, keepdims=True)
        var = jnp.mean(jnp.square(h - mu), axis=-1, keepdims=True)
        return (h - mu) * jax.lax.rsqrt(var + eps) * w + b

    h = ln(x, params["ln1_w"], params["ln1_b"])
    qkv = h @ params["qkv_w"].T + params["qkv_b"]
    q, k, v = jnp.split(qkv, 3, axis=-1)
    q = q * (1.0 / np.sqrt(Dh))
    qh = q.reshape(B, S, num_heads, Dh).transpose(0, 2, 1, 3)
    kh = k.reshape(B, S, num_heads, Dh).transpose(0, 2, 1, 3)
    vh = v.reshape(B, S, num_heads, Dh).transpose(0, 2, 1, 3)
    s = jnp.einsum("bhqd,bhkd->bhqk", qh, kh)
    p = jax.nn.softmax(s, axis=-1)
    ctx = jnp.einsum("bhqk,bhkd->bhqd", p, vh)
    ctx = ctx.transpose(0, 2, 1, 3).reshape(B, S, E)
    x1 = x + ctx @ params["out_w"].T + params["out_b"]

    h2 = ln(x1, params["ln2_w"], params["ln2_b"])
    m = h2 @ params["fc1_w"].T + params["fc1_b"]
    m = 0.5 * m * (1.0 + jax.lax.erf(m / np.sqrt(2.0)))
    m = m @ params["fc2_w"].T + params["fc2_b"]
    out = x1 + m
    return jnp.transpose(out, (1, 0, 2))


# ---------------------------------------------------------------------------
if __name__ == "__main__":
    # Small shapes; tiles chosen so both the multi-tile projection pass and the
    # multi-(q,kv)-tile flash path are exercised.
    S, B, E = 32, 2, 32
    NUM_HEADS = 4
    MLP_RATIO = 4.0
    HID = int(E * MLP_RATIO)

    key = jax.random.PRNGKey(0)
    ks = jax.random.split(key, 13)

    def rnd(k, shape, scale=0.05):
        return scale * jax.random.normal(k, shape, jnp.float32)

    params = {
        # LayerNorms (nn.LayerNorm(embed_dim))
        "ln1_w": jnp.ones((E,), jnp.float32) + rnd(ks[0], (E,), 0.01),
        "ln1_b": rnd(ks[1], (E,), 0.01),
        "ln2_w": jnp.ones((E,), jnp.float32) + rnd(ks[2], (E,), 0.01),
        "ln2_b": rnd(ks[3], (E,), 0.01),
        # nn.MultiheadAttention: fused in_proj (3E, E) + bias, out_proj (E, E) + bias
        "qkv_w": rnd(ks[4], (3 * E, E)),
        "qkv_b": rnd(ks[5], (3 * E,)),
        "out_w": rnd(ks[6], (E, E)),
        "out_b": rnd(ks[7], (E,)),
        # MLP: Linear(E, E*mlp_ratio) -> GELU -> Linear(E*mlp_ratio, E)
        "fc1_w": rnd(ks[8], (HID, E)),
        "fc1_b": rnd(ks[9], (HID,)),
        "fc2_w": rnd(ks[10], (E, HID)),
        "fc2_b": rnd(ks[11], (E,)),
    }

    x = jax.random.normal(ks[12], (S, B, E), jnp.float32)

    y = jax.block_until_ready(block_forward(x, params, NUM_HEADS,
                                            q_tile=16, kv_tile=16))
    y_ref = jax.block_until_ready(block_reference(x, params, NUM_HEADS))

    assert y.shape == (S, B, E)
    # bf16 MXU operands -> slightly relaxed tolerance.
    assert np.allclose(np.asarray(y), np.asarray(y_ref), atol=2e-2, rtol=2e-2), (
        "Pallas kernel disagrees with JAX reference"
    )
    print("KERNEL_OK")
</pallas_src>

<mosaic_0001>
module attributes {stable_mosaic.version = 11 : i64} {
  func.func @qkv_proj_kernel(%arg0: i32, %arg1: i32, %arg2: memref<1x16x32xf32, #tpu.memory_space<vmem>>, %arg3: memref<1x32xf32, #tpu.memory_space<vmem>>, %arg4: memref<1x32xf32, #tpu.memory_space<vmem>>, %arg5: memref<32x96xbf16, #tpu.memory_space<vmem>>, %arg6: memref<1x96xf32, #tpu.memory_space<vmem>>, %arg7: memref<1x4x16x8xbf16, #tpu.memory_space<vmem>>, %arg8: memref<1x4x16x8xbf16, #tpu.memory_space<vmem>>, %arg9: memref<1x4x16x8xbf16, #tpu.memory_space<vmem>>) attributes {dimension_semantics = [#tpu.dimension_semantics<parallel>, #tpu.dimension_semantics<parallel>], iteration_bounds = array<i64: 2, 2>, scalar_prefetch = 0 : i64, scratch_operands = 0 : i64, tpu.core_type = #tpu.core_type<tc>, window_params = [{transform_indices = @transform_0, window_bounds = array<i64: 1, 16, 32>}, {pipeline_mode = #tpu.pipeline_mode<synchronous>, transform_indices = @transform_1, window_bounds = array<i64: 1, 32>}, {pipeline_mode = #tpu.pipeline_mode<synchronous>, transform_indices = @transform_2, window_bounds = array<i64: 1, 32>}, {pipeline_mode = #tpu.pipeline_mode<synchronous>, transform_indices = @transform_3, window_bounds = array<i64: 32, 96>}, {pipeline_mode = #tpu.pipeline_mode<synchronous>, transform_indices = @transform_4, window_bounds = array<i64: 1, 96>}, {transform_indices = @transform_5, window_bounds = array<i64: 1, 4, 16, 8>}, {transform_indices = @transform_6, window_bounds = array<i64: 1, 4, 16, 8>}, {transform_indices = @transform_7, window_bounds = array<i64: 1, 4, 16, 8>}]} {
    %c0 = arith.constant 0 : index
    %c0_0 = arith.constant 0 : index
    %c0_1 = arith.constant 0 : index
    %0 = vector.load %arg2[%c0, %c0_0, %c0_1] : memref<1x16x32xf32, #tpu.memory_space<vmem>>, vector<1x16x32xf32>
    %1 = vector.shape_cast %0 : vector<1x16x32xf32> to vector<16x32xf32>
    %c0_2 = arith.constant 0 : index
    %c0_3 = arith.constant 0 : index
    %2 = vector.load %arg3[%c0_2, %c0_3] : memref<1x32xf32, #tpu.memory_space<vmem>>, vector<1x32xf32>
    %c0_4 = arith.constant 0 : index
    %c0_5 = arith.constant 0 : index
    %3 = vector.load %arg4[%c0_4, %c0_5] : memref<1x32xf32, #tpu.memory_space<vmem>>, vector<1x32xf32>
    %cst = arith.constant dense<0.000000e+00> : vector<16xf32>
    %4 = vector.multi_reduction <add>, %1, %cst [1] : vector<16x32xf32> to vector<16xf32>
    %5 = vector.shape_cast %4 : vector<16xf32> to vector<16x1xf32>
    %cst_6 = arith.constant 3.200000e+01 : f32
    %6 = vector.broadcast %cst_6 : f32 to vector<16x1xf32>
    %7 = arith.divf %5, %6 : vector<16x1xf32>
    %8 = vector.broadcast %7 : vector<16x1xf32> to vector<16x32xf32>
    %9 = arith.subf %1, %8 : vector<16x32xf32>
    %10 = arith.mulf %9, %9 : vector<16x32xf32>
    %cst_7 = arith.constant dense<0.000000e+00> : vector<16xf32>
    %11 = vector.multi_reduction <add>, %10, %cst_7 [1] : vector<16x32xf32> to vector<16xf32>
    %12 = vector.shape_cast %11 : vector<16xf32> to vector<16x1xf32>
    %cst_8 = arith.constant 3.200000e+01 : f32
    %13 = vector.broadcast %cst_8 : f32 to vector<16x1xf32>
    %14 = arith.divf %12, %13 : vector<16x1xf32>
    %15 = vector.broadcast %7 : vector<16x1xf32> to vector<16x32xf32>
    %16 = arith.subf %1, %15 : vector<16x32xf32>
    %cst_9 = arith.constant 9.99999974E-6 : f32
    %17 = vector.broadcast %cst_9 : f32 to vector<16x1xf32>
    %18 = arith.addf %14, %17 : vector<16x1xf32>
    %19 = math.rsqrt %18 : vector<16x1xf32>
    %20 = vector.broadcast %19 : vector<16x1xf32> to vector<16x32xf32>
    %21 = arith.mulf %16, %20 : vector<16x32xf32>
    %22 = vector.broadcast %2 : vector<1x32xf32> to vector<16x32xf32>
    %23 = arith.mulf %21, %22 : vector<16x32xf32>
    %24 = vector.broadcast %3 : vector<1x32xf32> to vector<16x32xf32>
    %25 = arith.addf %23, %24 : vector<16x32xf32>
    %26 = arith.truncf %25 : vector<16x32xf32> to vector<16x32xbf16>
    %c0_10 = arith.constant 0 : index
    %c0_11 = arith.constant 0 : index
    %27 = vector.load %arg5[%c0_10, %c0_11] : memref<32x96xbf16, #tpu.memory_space<vmem>>, vector<32x96xbf16>
    %cst_12 = arith.constant dense<0.000000e+00> : vector<16x96xf32>
    %28 = tpu.matmul %26, %27, %cst_12 {dimension_numbers = #tpu.dot_dimension_numbers<[1], [0], [0], [1], [0, 0, 1, 1], [], []>} : vector<16x32xbf16>, vector<32x96xbf16>, vector<16x96xf32> -> vector<16x96xf32>
    %c0_13 = arith.constant 0 : index
    %c0_14 = arith.constant 0 : index
    %29 = vector.load %arg6[%c0_13, %c0_14] : memref<1x96xf32, #tpu.memory_space<vmem>>, vector<1x96xf32>
    %30 = vector.broadcast %29 : vector<1x96xf32> to vector<16x96xf32>
    %31 = arith.addf %28, %30 : vector<16x96xf32>
    %32 = vector.extract_strided_slice %31 {offsets = [0, 0], sizes = [16, 8], strides = [1, 1]} : vector<16x96xf32> to vector<16x8xf32>
    %33 = arith.truncf %32 : vector<16x8xf32> to vector<16x8xbf16>
    %c0_15 = arith.constant 0 : index
    %c0_16 = arith.constant 0 : index
    %c0_17 = arith.constant 0 : index
    %c0_18 = arith.constant 0 : index
    %34 = vector.load %arg7[%c0_15, %c0_16, %c0_17, %c0_18] : memref<1x4x16x8xbf16, #tpu.memory_space<vmem>>, vector<1x1x16x8xbf16>
    %35 = vector.shape_cast %34 : vector<1x1x16x8xbf16> to vector<16x8xbf16>
    %36 = vector.shape_cast %33 : vector<16x8xbf16> to vector<1x1x16x8xbf16>
    tpu.vector_store %arg7[%c0_15, %c0_16, %c0_17, %c0_18], %36 {strides = array<i32>} : memref<1x4x16x8xbf16, #tpu.memory_space<vmem>>, vector<1x1x16x8xbf16>,
    %37 = vector.extract_strided_slice %31 {offsets = [0, 8], sizes = [16, 8], strides = [1, 1]} : vector<16x96xf32> to vector<16x8xf32>
    %38 = arith.truncf %37 : vector<16x8xf32> to vector<16x8xbf16>
    %c0_19 = arith.constant 0 : index
    %c1 = arith.constant 1 : index
    %c0_20 = arith.constant 0 : index
    %c0_21 = arith.constant 0 : index
    %39 = vector.load %arg7[%c0_19, %c1, %c0_20, %c0_21] : memref<1x4x16x8xbf16, #tpu.memory_space<vmem>>, vector<1x1x16x8xbf16>
    %40 = vector.shape_cast %39 : vector<1x1x16x8xbf16> to vector<16x8xbf16>
    %41 = vector.shape_cast %38 : vector<16x8xbf16> to vector<1x1x16x8xbf16>
    tpu.vector_store %arg7[%c0_19, %c1, %c0_20, %c0_21], %41 {strides = array<i32>} : memref<1x4x16x8xbf16, #tpu.memory_space<vmem>>, vector<1x1x16x8xbf16>,
    %42 = vector.extract_strided_slice %31 {offsets = [0, 16], sizes = [16, 8], strides = [1, 1]} : vector<16x96xf32> to vector<16x8xf32>
    %43 = arith.truncf %42 : vector<16x8xf32> to vector<16x8xbf16>
    %c0_22 = arith.constant 0 : index
    %c2 = arith.constant 2 : index
    %c0_23 = arith.constant 0 : index
    %c0_24 = arith.constant 0 : index
    %44 = vector.load %arg7[%c0_22, %c2, %c0_23, %c0_24] : memref<1x4x16x8xbf16, #tpu.memory_space<vmem>>, vector<1x1x16x8xbf16>
    %45 = vector.shape_cast %44 : vector<1x1x16x8xbf16> to vector<16x8xbf16>
    %46 = vector.shape_cast %43 : vector<16x8xbf16> to vector<1x1x16x8xbf16>
    tpu.vector_store %arg7[%c0_22, %c2, %c0_23, %c0_24], %46 {strides = array<i32>} : memref<1x4x16x8xbf16, #tpu.memory_space<vmem>>, vector<1x1x16x8xbf16>,
    %47 = vector.extract_strided_slice %31 {offsets = [0, 24], sizes = [16, 8], strides = [1, 1]} : vector<16x96xf32> to vector<16x8xf32>
    %48 = arith.truncf %47 : vector<16x8xf32> to vector<16x8xbf16>
    %c0_25 = arith.constant 0 : index
    %c3 = arith.constant 3 : index
    %c0_26 = arith.constant 0 : index
    %c0_27 = arith.constant 0 : index
    %49 = vector.load %arg7[%c0_25, %c3, %c0_26, %c0_27] : memref<1x4x16x8xbf16, #tpu.memory_space<vmem>>, vector<1x1x16x8xbf16>
    %50 = vector.shape_cast %49 : vector<1x1x16x8xbf16> to vector<16x8xbf16>
    %51 = vector.shape_cast %48 : vector<16x8xbf16> to vector<1x1x16x8xbf16>
    tpu.vector_store %arg7[%c0_25, %c3, %c0_26, %c0_27], %51 {strides = array<i32>} : memref<1x4x16x8xbf16, #tpu.memory_space<vmem>>, vector<1x1x16x8xbf16>,
    %52 = vector.extract_strided_slice %31 {offsets = [0, 32], sizes = [16, 8], strides = [1, 1]} : vector<16x96xf32> to vector<16x8xf32>
    %53 = arith.truncf %52 : vector<16x8xf32> to vector<16x8xbf16>
    %c0_28 = arith.constant 0 : index
    %c0_29 = arith.constant 0 : index
    %c0_30 = arith.constant 0 : index
    %c0_31 = arith.constant 0 : index
    %54 = vector.load %arg8[%c0_28, %c0_29, %c0_30, %c0_31] : memref<1x4x16x8xbf16, #tpu.memory_space<vmem>>, vector<1x1x16x8xbf16>
    %55 = vector.shape_cast %54 : vector<1x1x16x8xbf16> to vector<16x8xbf16>
    %56 = vector.shape_cast %53 : vector<16x8xbf16> to vector<1x1x16x8xbf16>
    tpu.vector_store %arg8[%c0_28, %c0_29, %c0_30, %c0_31], %56 {strides = array<i32>} : memref<1x4x16x8xbf16, #tpu.memory_space<vmem>>, vector<1x1x16x8xbf16>,
    %57 = vector.extract_strided_slice %31 {offsets = [0, 40], sizes = [16, 8], strides = [1, 1]} : vector<16x96xf32> to vector<16x8xf32>
    %58 = arith.truncf %57 : vector<16x8xf32> to vector<16x8xbf16>
    %c0_32 = arith.constant 0 : index
    %c1_33 = arith.constant 1 : index
    %c0_34 = arith.constant 0 : index
    %c0_35 = arith.constant 0 : index
    %59 = vector.load %arg8[%c0_32, %c1_33, %c0_34, %c0_35] : memref<1x4x16x8xbf16, #tpu.memory_space<vmem>>, vector<1x1x16x8xbf16>
    %60 = vector.shape_cast %59 : vector<1x1x16x8xbf16> to vector<16x8xbf16>
    %61 = vector.shape_cast %58 : vector<16x8xbf16> to vector<1x1x16x8xbf16>
    tpu.vector_store %arg8[%c0_32, %c1_33, %c0_34, %c0_35], %61 {strides = array<i32>} : memref<1x4x16x8xbf16, #tpu.memory_space<vmem>>, vector<1x1x16x8xbf16>,
    %62 = vector.extract_strided_slice %31 {offsets = [0, 48], sizes = [16, 8], strides = [1, 1]} : vector<16x96xf32> to vector<16x8xf32>
    %63 = arith.truncf %62 : vector<16x8xf32> to vector<16x8xbf16>
    %c0_36 = arith.constant 0 : index
    %c2_37 = arith.constant 2 : index
    %c0_38 = arith.constant 0 : index
    %c0_39 = arith.constant 0 : index
    %64 = vector.load %arg8[%c0_36, %c2_37, %c0_38, %c0_39] : memref<1x4x16x8xbf16, #tpu.memory_space<vmem>>, vector<1x1x16x8xbf16>
    %65 = vector.shape_cast %64 : vector<1x1x16x8xbf16> to vector<16x8xbf16>
    %66 = vector.shape_cast %63 : vector<16x8xbf16> to vector<1x1x16x8xbf16>
    tpu.vector_store %arg8[%c0_36, %c2_37, %c0_38, %c0_39], %66 {strides = array<i32>} : memref<1x4x16x8xbf16, #tpu.memory_space<vmem>>, vector<1x1x16x8xbf16>,
    %67 = vector.extract_strided_slice %31 {offsets = [0, 56], sizes = [16, 8], strides = [1, 1]} : vector<16x96xf32> to vector<16x8xf32>
    %68 = arith.truncf %67 : vector<16x8xf32> to vector<16x8xbf16>
    %c0_40 = arith.constant 0 : index
    %c3_41 = arith.constant 3 : index
    %c0_42 = arith.constant 0 : index
    %c0_43 = arith.constant 0 : index
    %69 = vector.load %arg8[%c0_40, %c3_41, %c0_42, %c0_43] : memref<1x4x16x8xbf16, #tpu.memory_space<vmem>>, vector<1x1x16x8xbf16>
    %70 = vector.shape_cast %69 : vector<1x1x16x8xbf16> to vector<16x8xbf16>
    %71 = vector.shape_cast %68 : vector<16x8xbf16> to vector<1x1x16x8xbf16>
    tpu.vector_store %arg8[%c0_40, %c3_41, %c0_42, %c0_43], %71 {strides = array<i32>} : memref<1x4x16x8xbf16, #tpu.memory_space<vmem>>, vector<1x1x16x8xbf16>,
    %72 = vector.extract_strided_slice %31 {offsets = [0, 64], sizes = [16, 8], strides = [1, 1]} : vector<16x96xf32> to vector<16x8xf32>
    %73 = arith.truncf %72 : vector<16x8xf32> to vector<16x8xbf16>
    %c0_44 = arith.constant 0 : index
    %c0_45 = arith.constant 0 : index
    %c0_46 = arith.constant 0 : index
    %c0_47 = arith.constant 0 : index
    %74 = vector.load %arg9[%c0_44, %c0_45, %c0_46, %c0_47] : memref<1x4x16x8xbf16, #tpu.memory_space<vmem>>, vector<1x1x16x8xbf16>
    %75 = vector.shape_cast %74 : vector<1x1x16x8xbf16> to vector<16x8xbf16>
    %76 = vector.shape_cast %73 : vector<16x8xbf16> to vector<1x1x16x8xbf16>
    tpu.vector_store %arg9[%c0_44, %c0_45, %c0_46, %c0_47], %76 {strides = array<i32>} : memref<1x4x16x8xbf16, #tpu.memory_space<vmem>>, vector<1x1x16x8xbf16>,
    %77 = vector.extract_strided_slice %31 {offsets = [0, 72], sizes = [16, 8], strides = [1, 1]} : vector<16x96xf32> to vector<16x8xf32>
    %78 = arith.truncf %77 : vector<16x8xf32> to vector<16x8xbf16>
    %c0_48 = arith.constant 0 : index
    %c1_49 = arith.constant 1 : index
    %c0_50 = arith.constant 0 : index
    %c0_51 = arith.constant 0 : index
    %79 = vector.load %arg9[%c0_48, %c1_49, %c0_50, %c0_51] : memref<1x4x16x8xbf16, #tpu.memory_space<vmem>>, vector<1x1x16x8xbf16>
    %80 = vector.shape_cast %79 : vector<1x1x16x8xbf16> to vector<16x8xbf16>
    %81 = vector.shape_cast %78 : vector<16x8xbf16> to vector<1x1x16x8xbf16>
    tpu.vector_store %arg9[%c0_48, %c1_49, %c0_50, %c0_51], %81 {strides = array<i32>} : memref<1x4x16x8xbf16, #tpu.memory_space<vmem>>, vector<1x1x16x8xbf16>,
    %82 = vector.extract_strided_slice %31 {offsets = [0, 80], sizes = [16, 8], strides = [1, 1]} : vector<16x96xf32> to vector<16x8xf32>
    %83 = arith.truncf %82 : vector<16x8xf32> to vector<16x8xbf16>
    %c0_52 = arith.constant 0 : index
    %c2_53 = arith.constant 2 : index
    %c0_54 = arith.constant 0 : index
    %c0_55 = arith.constant 0 : index
    %84 = vector.load %arg9[%c0_52, %c2_53, %c0_54, %c0_55] : memref<1x4x16x8xbf16, #tpu.memory_space<vmem>>, vector<1x1x16x8xbf16>
    %85 = vector.shape_cast %84 : vector<1x1x16x8xbf16> to vector<16x8xbf16>
    %86 = vector.shape_cast %83 : vector<16x8xbf16> to vector<1x1x16x8xbf16>
    tpu.vector_store %arg9[%c0_52, %c2_53, %c0_54, %c0_55], %86 {strides = array<i32>} : memref<1x4x16x8xbf16, #tpu.memory_space<vmem>>, vector<1x1x16x8xbf16>,
    %87 = vector.extract_strided_slice %31 {offsets = [0, 88], sizes = [16, 8], strides = [1, 1]} : vector<16x96xf32> to vector<16x8xf32>
    %88 = arith.truncf %87 : vector<16x8xf32> to vector<16x8xbf16>
    %c0_56 = arith.constant 0 : index
    %c3_57 = arith.constant 3 : index
    %c0_58 = arith.constant 0 : index
    %c0_59 = arith.constant 0 : index
    %89 = vector.load %arg9[%c0_56, %c3_57, %c0_58, %c0_59] : memref<1x4x16x8xbf16, #tpu.memory_space<vmem>>, vector<1x1x16x8xbf16>
    %90 = vector.shape_cast %89 : vector<1x1x16x8xbf16> to vector<16x8xbf16>
    %91 = vector.shape_cast %88 : vector<16x8xbf16> to vector<1x1x16x8xbf16>
    tpu.vector_store %arg9[%c0_56, %c3_57, %c0_58, %c0_59], %91 {strides = array<i32>} : memref<1x4x16x8xbf16, #tpu.memory_space<vmem>>, vector<1x1x16x8xbf16>,
    return
  }
  func.func @transform_0(%arg0: i32, %arg1: i32) -> (i32, i32, i32) {
    %c0_i32 = arith.constant 0 : i32
    %c0_i32_0 = arith.constant 0 : i32
    return %arg0, %arg1, %c0_i32 : i32, i32, i32
  }
  func.func @transform_1(%arg0: i32, %arg1: i32) -> (i32, i32) {
    %c0_i32 = arith.constant 0 : i32
    %c0_i32_0 = arith.constant 0 : i32
    %c0_i32_1 = arith.constant 0 : i32
    return %c0_i32, %c0_i32_0 : i32, i32
  }
  func.func @transform_2(%arg0: i32, %arg1: i32) -> (i32, i32) {
    %c0_i32 = arith.constant 0 : i32
    %c0_i32_0 = arith.constant 0 : i32
    %c0_i32_1 = arith.constant 0 : i32
    return %c0_i32, %c0_i32_0 : i32, i32
  }
  func.func @transform_3(%arg0: i32, %arg1: i32) -> (i32, i32) {
    %c0_i32 = arith.constant 0 : i32
    %c0_i32_0 = arith.constant 0 : i32
    %c0_i32_1 = arith.constant 0 : i32
    return %c0_i32, %c0_i32_0 : i32, i32
  }
  func.func @transform_4(%arg0: i32, %arg1: i32) -> (i32, i32) {
    %c0_i32 = arith.constant 0 : i32
    %c0_i32_0 = arith.constant 0 : i32
    %c0_i32_1 = arith.constant 0 : i32
    return %c0_i32, %c0_i32_0 : i32, i32
  }
  func.func @transform_5(%arg0: i32, %arg1: i32) -> (i32, i32, i32, i32) {
    %c0_i32 = arith.constant 0 : i32
    %c0_i32_0 = arith.constant 0 : i32
    %c0_i32_1 = arith.constant 0 : i32
    return %arg0, %c0_i32, %arg1, %c0_i32_0 : i32, i32, i32, i32
  }
  func.func @transform_6(%arg0: i32, %arg1: i32) -> (i32, i32, i32, i32) {
    %c0_i32 = arith.constant 0 : i32
    %c0_i32_0 = arith.constant 0 : i32
    %c0_i32_1 = arith.constant 0 : i32
    return %arg0, %c0_i32, %arg1, %c0_i32_0 : i32, i32, i32, i32
  }
  func.func @transform_7(%arg0: i32, %arg1: i32) -> (i32, i32, i32, i32) {
    %c0_i32 = arith.constant 0 : i32
    %c0_i32_0 = arith.constant 0 : i32
    %c0_i32_1 = arith.constant 0 : i32
    return %arg0, %c0_i32, %arg1, %c0_i32_0 : i32, i32, i32, i32
  }
}

</mosaic_0001>

<llo_original>
// kernel: tpu_custom_call.1
$region0: #{tpu_custom_call.1}
  #allocation0 [shape = 'u32[]', space=smem, size = 0x4, offset = 0x4, fixed_abs, tag = 'smem constant byte address 0x4 - core index']
  #allocation1 [shape = 'u32[144,128]{1,0:T(1,128)}', space=vmem, size = 0x12000, scoped, tag = 'internal scratch']
  %s0 = inlined_call_operand.hbm [shape: f32[2,32,32], index: 0, kind: input, shape index: {}]
  %s1 = inlined_call_operand.vmem [shape: f32[1,32], index: 1, kind: input, shape index: {}]
  %s2 = inlined_call_operand.vmem [shape: f32[1,32], index: 2, kind: input, shape index: {}]
  %s3 = inlined_call_operand.hbm [shape: bf16[32,96], index: 3, kind: input, shape index: {}]
  %s4 = inlined_call_operand.vmem [shape: f32[1,96], index: 4, kind: input, shape index: {}]
  %s5 = inlined_call_operand.vmem [shape: bf16[2,4,32,8], index: 5, kind: output, shape index: {0}]
  %s6 = inlined_call_operand.vmem [shape: bf16[2,4,32,8], index: 6, kind: output, shape index: {1}]
  %s7 = inlined_call_operand.vmem [shape: bf16[2,4,32,8], index: 7, kind: output, shape index: {2}]
  %8 = xla_tuple %s5, %s6, %s7
  %s9 = sld [smem:[#allocation0]]
  $region188: #{tpu_custom_call.1} parent=0
    _
  %s11 = ssub.s32 1, %s9
  %s12 = scalar_select 0, %s11, %s9
  $region1: #{tpu_custom_call.1} parent=0
    #allocation2 [shape = 'u8[16384]{0}', space=vmem, size = 0x4000, scoped, tag = 'input window, operand 0']
    #allocation3 [shape = 's32[2]{0}', space=sflag, size = 0x8, scoped, tag = 'scoped memory for tpu_custom_call.1']
    #allocation4 [shape = 'u8[8192]{0}', space=vmem, size = 0x2000, scoped, tag = 'input window, operand 3, single buffered']
    #allocation5 [shape = 's32[1]{0}', space=sflag, size = 0x4, scoped, tag = 'scoped memory for tpu_custom_call.1']
    #allocation6 [shape = 'u8[32768]{0}', space=vmem, size = 0x8000, scoped, tag = 'output window, operand 0']
    #allocation7 [shape = 'u8[32768]{0}', space=vmem, size = 0x8000, scoped, tag = 'output window, operand 1']
    #allocation8 [shape = 'u8[32768]{0}', space=vmem, size = 0x8000, scoped, tag = 'output window, operand 2']
    %13 = vsyncpa [#allocation3], 0
    %s14 = scalar_lea.sflag [#allocation3], 1
    %15 = vsyncpa %s14, 0
    %16 = vsyncpa [#allocation5], 0
    loop: start=0, step=1, limit=6
    $region2: #{tpu_custom_call.1} parent=1 // loop_pre_header
      _
    $region3: #{tpu_custom_call.1} parent=1 // loop_header
      %s18 = sphi 0, %s22
      %p19 = scmp.ge.s32.totalorder %s18, 6
      %s25 = sphi 0, %s37
      %s26 = sphi 0, %s33
      %s27 = sphi 0, %s25
      %s28 = sphi 0, %s26
      %s29 = sphi 0, %s27
      %s30 = sphi 0, %s28
      %s42 = sphi 0, %s44
      %s45 = sphi 0, %s42
      %s46 = sphi 0, %s45
      %s62 = sphi 0, %s46
      %s66 = sphi 0, %s66
      %s68 = sphi 0, %s66
      %s69 = sphi 0, %s68
      %s83 = sphi 0, %s69
      %s87 = sphi 0, %s87
      %s89 = sphi 0, %s87
      %s90 = sphi 0, %s89
      %s104 = sphi 0, %s90
      %s108 = sphi 0, %s108
      %s110 = sphi 0, %s108
      %s111 = sphi 0, %s110
      %s125 = sphi 0, %s111
      %s129 = sphi 0, %s129
      %s131 = sphi 0, %s129
      %s132 = sphi 0, %s131
      %s146 = sphi 0, %s132
      %s154 = sphi 0, %s156
      %s157 = sphi 0, %s154
      %s158 = sphi 0, %s157
      %s174 = sphi 0, %s158
      %s182 = sphi 0, %s184
      %s185 = sphi 0, %s182
      %s186 = sphi 0, %s185
      %s202 = sphi 0, %s186
      %s210 = sphi 0, %s212
      %s213 = sphi 0, %s210
      %s214 = sphi 0, %s213
      %s230 = sphi 0, %s214
    $region4: #{tpu_custom_call.1} parent=1 // loop_header_branch
      %21 = sbr.rel (%p19) target = $region8
    $region5: #{tpu_custom_call.1} parent=1 // loop_body
      %s23 = ssub.s32 %s18, 1
      %s24 = ssub.s32 %s18, 2
      %s31 = sadd.s32 1, %s26
      %p32 = scmp.ge.s32.totalorder %s31, 2
      %s33 = scalar_select %p32, 0, %s31
      %s34 = sadd.s32 1, %s25
      %s35 = scalar_select %p32, %s34, %s25
      %p36 = scmp.ge.s32.totalorder %s35, 2
      %s37 = scalar_select %p36, 0, %s35
      %s38 = ssub.s32 %s25, %s37
      %s39 = ssub.s32 %s26, %s33
      %s40 = sor.u32 %s38, %s39
      %p41 = scmp.eq.s32.totalorder %s40, 0
      %s43 = sadd.s32 %s42, 1
      %s44 = scalar_select %p41, %s42, %s43
      %p47 = pneg %p41
      %p48 = scmp.eq.s32.totalorder %s18, 3
      %p49 = por %p47, %p48
      %p50 = scmp.ne.s32.totalorder %s42, %s45
      %p51 = scmp.eq.s32.totalorder %s18, 0
      %p52 = por %p50, %p51
      %p53 = scmp.ne.s32.totalorder %s42, %s45
      %p54 = scmp.eq.s32.totalorder %s23, 3
      %p55 = por %p53, %p54
      %p56 = scmp.ne.s32.totalorder %s45, %s46
      %p57 = scmp.eq.s32.totalorder %s23, 0
      %p58 = por %p56, %p57
      %p59 = scmp.ne.s32.totalorder %s45, %s46
      %p60 = scmp.eq.s32.totalorder %s24, 3
      %p61 = por %p59, %p60
      %p63 = scmp.ne.s32.totalorder %s46, %s62
      %p64 = scmp.eq.s32.totalorder %s24, 0
      %p65 = por %p63, %p64
      %s67 = sadd.s32 %s66, 1
      %p70 = scmp.eq.s32.totalorder %s18, 3
      %p71 = scmp.ne.s32.totalorder %s66, %s68
      %p72 = scmp.eq.s32.totalorder %s18, 0
      %p73 = por %p71, %p72
      %p74 = scmp.ne.s32.totalorder %s66, %s68
      %p75 = scmp.eq.s32.totalorder %s23, 3
      %p76 = por %p74, %p75
      %p77 = scmp.ne.s32.totalorder %s68, %s69
      %p78 = scmp.eq.s32.totalorder %s23, 0
      %p79 = por %p77, %p78
      %p80 = scmp.ne.s32.totalorder %s68, %s69
      %p81 = scmp.eq.s32.totalorder %s24, 3
      %p82 = por %p80, %p81
      %p84 = scmp.ne.s32.totalorder %s69, %s83
      %p85 = scmp.eq.s32.totalorder %s24, 0
      %p86 = por %p84, %p85
      %s88 = sadd.s32 %s87, 1
      %p91 = scmp.eq.s32.totalorder %s18, 3
      %p92 = scmp.ne.s32.totalorder %s87, %s89
      %p93 = scmp.eq.s32.totalorder %s18, 0
      %p94 = por %p92, %p93
      %p95 = scmp.ne.s32.totalorder %s87, %s89
      %p96 = scmp.eq.s32.totalorder %s23, 3
      %p97 = por %p95, %p96
      %p98 = scmp.ne.s32.totalorder %s89, %s90
      %p99 = scmp.eq.s32.totalorder %s23, 0
      %p100 = por %p98, %p99
      %p101 = scmp.ne.s32.totalorder %s89, %s90
      %p102 = scmp.eq.s32.totalorder %s24, 3
      %p103 = por %p101, %p102
      %p105 = scmp.ne.s32.totalorder %s90, %s104
      %p106 = scmp.eq.s32.totalorder %s24, 0
      %p107 = por %p105, %p106
      %s109 = sadd.s32 %s108, 1
      %p112 = scmp.eq.s32.totalorder %s18, 3
      %p113 = scmp.ne.s32.totalorder %s108, %s110
      %p114 = scmp.eq.s32.totalorder %s18, 0
      %p115 = por %p113, %p114
      %p116 = scmp.ne.s32.totalorder %s108, %s110
      %p117 = scmp.eq.s32.totalorder %s23, 3
      %p118 = por %p116, %p117
      %p119 = scmp.ne.s32.totalorder %s110, %s111
      %p120 = scmp.eq.s32.totalorder %s23, 0
      %p121 = por %p119, %p120
      %p122 = scmp.ne.s32.totalorder %s110, %s111
      %p123 = scmp.eq.s32.totalorder %s24, 3
      %p124 = por %p122, %p123
      %p126 = scmp.ne.s32.totalorder %s111, %s125
      %p127 = scmp.eq.s32.totalorder %s24, 0
      %p128 = por %p126, %p127
      %s130 = sadd.s32 %s129, 1
      %p133 = scmp.eq.s32.totalorder %s18, 3
      %p134 = scmp.ne.s32.totalorder %s129, %s131
      %p135 = scmp.eq.s32.totalorder %s18, 0
      %p136 = por %p134, %p135
      %p137 = scmp.ne.s32.totalorder %s129, %s131
      %p138 = scmp.eq.s32.totalorder %s23, 3
      %p139 = por %p137, %p138
      %p140 = scmp.ne.s32.totalorder %s131, %s132
      %p141 = scmp.eq.s32.totalorder %s23, 0
      %p142 = por %p140, %p141
      %p143 = scmp.ne.s32.totalorder %s131, %s132
      %p144 = scmp.eq.s32.totalorder %s24, 3
      %p145 = por %p143, %p144
      %p147 = scmp.ne.s32.totalorder %s132, %s146
      %p148 = scmp.eq.s32.totalorder %s24, 0
      %p149 = por %p147, %p148
      %s150 = ssub.s32 %s25, %s37
      %s151 = ssub.s32 %s26, %s33
      %s152 = sor.u32 %s150, %s151
      %p153 = scmp.eq.s32.totalorder %s152, 0
      %s155 = sadd.s32 %s154, 1
      %s156 = scalar_select %p153, %s154, %s155
      %p159 = pneg %p153
      %p160 = scmp.eq.s32.totalorder %s18, 3
      %p161 = por %p159, %p160
      %p162 = scmp.ne.s32.totalorder %s154, %s157
      %p163 = scmp.eq.s32.totalorder %s18, 0
      %p164 = por %p162, %p163
      %p165 = scmp.ne.s32.totalorder %s154, %s157
      %p166 = scmp.eq.s32.totalorder %s23, 3
      %p167 = por %p165, %p166
      %p168 = scmp.ne.s32.totalorder %s157, %s158
      %p169 = scmp.eq.s32.totalorder %s23, 0
      %p170 = por %p168, %p169
      %p171 = scmp.ne.s32.totalorder %s157, %s158
      %p172 = scmp.eq.s32.totalorder %s24, 3
      %p173 = por %p171, %p172
      %p175 = scmp.ne.s32.totalorder %s158, %s174
      %p176 = scmp.eq.s32.totalorder %s24, 0
      %p177 = por %p175, %p176
      %s178 = ssub.s32 %s25, %s37
      %s179 = ssub.s32 %s26, %s33
      %s180 = sor.u32 %s178, %s179
      %p181 = scmp.eq.s32.totalorder %s180, 0
      %s183 = sadd.s32 %s182, 1
      %s184 = scalar_select %p181, %s182, %s183
      %p187 = pneg %p181
      %p188 = scmp.eq.s32.totalorder %s18, 3
      %p189 = por %p187, %p188
      %p190 = scmp.ne.s32.totalorder %s182, %s185
      %p191 = scmp.eq.s32.totalorder %s18, 0
      %p192 = por %p190, %p191
      %p193 = scmp.ne.s32.totalorder %s182, %s185
      %p194 = scmp.eq.s32.totalorder %s23, 3
      %p195 = por %p193, %p194
      %p196 = scmp.ne.s32.totalorder %s185, %s186
      %p197 = scmp.eq.s32.totalorder %s23, 0
      %p198 = por %p196, %p197
      %p199 = scmp.ne.s32.totalorder %s185, %s186
      %p200 = scmp.eq.s32.totalorder %s24, 3
      %p201 = por %p199, %p200
      %p203 = scmp.ne.s32.totalorder %s186, %s202
      %p204 = scmp.eq.s32.totalorder %s24, 0
      %p205 = por %p203, %p204
      %s206 = ssub.s32 %s25, %s37
      %s207 = ssub.s32 %s26, %s33
      %s208 = sor.u32 %s206, %s207
      %p209 = scmp.eq.s32.totalorder %s208, 0
      %s211 = sadd.s32 %s210, 1
      %s212 = scalar_select %p209, %s210, %s211
      %p215 = pneg %p209
      %p216 = scmp.eq.s32.totalorder %s18, 3
      %p217 = por %p215, %p216
      %p218 = scmp.ne.s32.totalorder %s210, %s213
      %p219 = scmp.eq.s32.totalorder %s18, 0
      %p220 = por %p218, %p219
      %p221 = scmp.ne.s32.totalorder %s210, %s213
      %p222 = scmp.eq.s32.totalorder %s23, 3
      %p223 = por %p221, %p222
      %p224 = scmp.ne.s32.totalorder %s213, %s214
      %p225 = scmp.eq.s32.totalorder %s23, 0
      %p226 = por %p224, %p225
      %p227 = scmp.ne.s32.totalorder %s213, %s214
      %p228 = scmp.eq.s32.totalorder %s24, 3
      %p229 = por %p227, %p228
      %p231 = scmp.ne.s32.totalorder %s214, %s230
      %p232 = scmp.eq.s32.totalorder %s24, 0
      %p233 = por %p231, %p232
      %p234 = scmp.le.s32.totalorder 1, %s18
      %p235 = scmp.lt.s32.totalorder %s18, 5
      %p236 = pnand %p234, %p235
      %p237 = pneg %p236
      // Predicated region
      $region9: #{tpu_custom_call.1} parent=5 // pred_check
        _
      $region10: #{tpu_custom_call.1} parent=5 // pred_check_branch
        %239 = sbr.rel (%p236) target = $region12
      $region11: #{tpu_custom_call.1} parent=5 // pred_region
        %s240 = ssub.s32 %s18, 1
        // Predicated region
        $region13: #{tpu_custom_call.1} parent=11 // pred_check
          %p241 = pneg %p79
        $region14: #{tpu_custom_call.1} parent=11 // pred_check_branch
          %243 = sbr.rel (%p241) target = $region16
        $region15: #{tpu_custom_call.1} parent=11 // pred_region
          _
        $region16: #{tpu_custom_call.1} parent=11 // pred_fallthru
          _
        // Predicated region
        $region17: #{tpu_custom_call.1} parent=11 // pred_check
          %p244 = pneg %p100
        $region18: #{tpu_custom_call.1} parent=11 // pred_check_branch
          %246 = sbr.rel (%p244) target = $region20
        $region19: #{tpu_custom_call.1} parent=11 // pred_region
          _
        $region20: #{tpu_custom_call.1} parent=11 // pred_fallthru
          _
        // Predicated region
        $region21: #{tpu_custom_call.1} parent=11 // pred_check
          %p247 = pneg %p121
        $region22: #{tpu_custom_call.1} parent=11 // pred_check_branch
          %249 = sbr.rel (%p247) target = $region24
        $region23: #{tpu_custom_call.1} parent=11 // pred_region
          %s251 = ssub.s32 256, 256
          %252 = vsyncadd [#allocation5], %s251
          %s253 = sshll.u32 [#allocation4], 4
          %s254 = int_to_ptr.vmem [resolvable:$true] %s253
          %259 = dma.hbm_to_vmem [thread:$0]  %s3, 256, %s254, [#allocation5], 64, 64, 4
        $region24: #{tpu_custom_call.1} parent=11 // pred_fallthru
          _
        // Predicated region
        $region25: #{tpu_custom_call.1} parent=11 // pred_check
          %p260 = pneg %p142
        $region26: #{tpu_custom_call.1} parent=11 // pred_check_branch
          %262 = sbr.rel (%p260) target = $region28
        $region27: #{tpu_custom_call.1} parent=11 // pred_region
          _
        $region28: #{tpu_custom_call.1} parent=11 // pred_fallthru
          _
      $region12: #{tpu_custom_call.1} parent=5 // pred_fallthru
        _
      %p263 = scmp.lt.s32.totalorder %s18, 4
      // Predicated region
      $region29: #{tpu_custom_call.1} parent=5 // pred_check
        %p264 = pneg %p263
      $region30: #{tpu_custom_call.1} parent=5 // pred_check_branch
        %266 = sbr.rel (%p264) target = $region32
      $region31: #{tpu_custom_call.1} parent=5 // pred_region
        // Predicated region
        $region33: #{tpu_custom_call.1} parent=31 // pred_check
          %p267 = pneg %p52
        $region34: #{tpu_custom_call.1} parent=31 // pred_check_branch
          %269 = sbr.rel (%p267) target = $region36
        $region35: #{tpu_custom_call.1} parent=31 // pred_region
          %s270 = sand.u32 %s42, 1
          %s271 = scalar_lea.sflag [#allocation3], %s270
          %s272 = sand.u32 %s42, 1
          %s273 = smul.addr %s272, 16
          %s274 = scalar_lea.vmem [#allocation2], %s273
          %s275 = smul.u32 2, %s26
          %s277 = ssub.s32 256, 256
          %278 = vsyncadd %s271, %s277
          %s279 = smul.addr %s25, 4
          %s280 = sadd.s32 %s275, %s279
          %s281 = smul.addr %s280, 128
          %s282 = scalar_lea.hbm %s0, %s281
          %s283 = sshll.u32 %s274, 4
          %s284 = int_to_ptr.vmem [resolvable:$true] %s283
          %289 = dma.hbm_to_vmem [thread:$0]  %s282, 256, %s284, %s271, 128, 128, 8
        $region36: #{tpu_custom_call.1} parent=31 // pred_fallthru
          _
      $region32: #{tpu_custom_call.1} parent=5 // pred_fallthru
        _
      %p290 = scmp.le.s32.totalorder 1, %s18
      %p291 = scmp.lt.s32.totalorder %s18, 5
      %p292 = pnand %p290, %p291
      %p293 = pneg %p292
      // Predicated region
      $region37: #{tpu_custom_call.1} parent=5 // pred_check
        _
      $region38: #{tpu_custom_call.1} parent=5 // pred_check_branch
        %295 = sbr.rel (%p292) target = $region40
      $region39: #{tpu_custom_call.1} parent=5 // pred_region
        %s296 = ssub.s32 %s18, 1
        %s297 = sand.u32 %s45, 1
        %s298 = scalar_lea.sflag [#allocation3], %s297
        %s299 = sand.u32 %s45, 1
        %s300 = smul.addr %s299, 16
        %s301 = scalar_lea.vmem [#allocation2], %s300
        // Predicated region
        $region41: #{tpu_custom_call.1} parent=39 // pred_check
          %p302 = pneg %p58
        $region42: #{tpu_custom_call.1} parent=39 // pred_check_branch
          %304 = sbr.rel (%p302) target = $region44
        $region43: #{tpu_custom_call.1} parent=39 // pred_region
          %305 = dma.done %s298, 256
        $region44: #{tpu_custom_call.1} parent=39 // pred_fallthru
          _
        // Predicated region
        $region45: #{tpu_custom_call.1} parent=39 // pred_check
          %p306 = pneg %p121
        $region46: #{tpu_custom_call.1} parent=39 // pred_check_branch
          %308 = sbr.rel (%p306) target = $region48
        $region47: #{tpu_custom_call.1} parent=39 // pred_region
          %309 = dma.done [#allocation5], 256
        $region48: #{tpu_custom_call.1} parent=39 // pred_fallthru
          _
        %s310 = sand.u32 %s45, 1
        %s311 = scalar_lea.sflag [#allocation3], %s310
        %s312 = sand.u32 %s45, 1
        %s313 = smul.addr %s312, 16
        %s314 = scalar_lea.vmem [#allocation2], %s313
        %p315 = pneg %p58
        %p316 = pneg %p55
        %p317 = pneg %p79
        %p318 = pneg %p76
        %p319 = pneg %p100
        %p320 = pneg %p97
        %p321 = pneg %p121
        %p322 = pneg %p118
        %p323 = pneg %p142
        %p324 = pneg %p139
        %p325 = pneg %p170
        %p326 = pneg %p167
        %s327 = sand.u32 %s157, 1
        %s328 = sand.u32 %s157, 1
        %s329 = smul.addr %s328, 32
        %s330 = scalar_lea.vmem [#allocation6], %s329
        %p331 = pneg %p198
        %p332 = pneg %p195
        %s333 = sand.u32 %s185, 1
        %s334 = sand.u32 %s185, 1
        %s335 = smul.addr %s334, 32
        %s336 = scalar_lea.vmem [#allocation7], %s335
        %p337 = pneg %p226
        %p338 = pneg %p223
        %s339 = sand.u32 %s213, 1
        %s340 = sand.u32 %s213, 1
        %s341 = smul.addr %s340, 32
        %s342 = scalar_lea.vmem [#allocation8], %s341
        %s343 = smul.u32 2, %s28
        %s344 = smul.u32 2, %s28
        %s345 = smul.u32 2, %s28
        %s346 = smul.u32 2, %s28
        %v348 = vld [vmem:[%s301] sm:$0xff]
        %v349 = vld [vmem:[%s301 + $0x8] sm:$0xff]
        %v350 = vld [vmem:[%s1] sm:$0x1]
        %v351 = vld [vmem:[%s2] sm:$0x1]
        %vm352 = vcmask 261120
        %v353 = vsel %vm352, %v348, 0.0
        %354 = vadd.xlane.f32.xlu0 %v353
        %v355 = vpop.xlane.xlu0 %354
        %v356 = vsel %vm352, %v349, 0.0
        %357 = vadd.xlane.f32.xlu0 %v356
        %v358 = vpop.xlane.xlu0 %357
        %v359 = vrcp.pop 32.0
        %v360 = vmul.f32 %v355, %v359
        %v361 = vmul.f32 %v358, %v359
        %v362 = vsub.f32 %v348, %v360
        %v363 = vsub.f32 %v349, %v361
        %v364 = vmul.f32 %v362, %v362
        %v365 = vmul.f32 %v363, %v363
        %v366 = vsel %vm352, %v364, 0.0
        %367 = vadd.xlane.f32.xlu0 %v366
        %v368 = vpop.xlane.xlu0 %367
        %v369 = vsel %vm352, %v365, 0.0
        %370 = vadd.xlane.f32.xlu0 %v369
        %v371 = vpop.xlane.xlu0 %370
        %v372 = vmul.f32 %v368, %v359
        %v373 = vmul.f32 %v371, %v359
        %v374 = vadd.f32 %v372, 1e-05
        %v375 = vadd.f32 %v373, 1e-05
        %v376 = vrsqrt.pop %v374
        %v377 = vrsqrt.pop %v375
        %v378 = vmul.f32 %v362, %v376
        %v379 = vmul.f32 %v363, %v377
        %v381 = vlaneseq
        %v382 = vshrl.u32 %v381, 7
        %v383 = vsub.s32 0, %v382
        %v384 = vrot.slane %v350, %v383
        %v386 = vmul.f32 %v378, %v384
        %v387 = vmul.f32 %v379, %v384
        %v389 = vlaneseq
        %v390 = vshrl.u32 %v389, 7
        %v391 = vsub.s32 0, %v390
        %v392 = vrot.slane %v351, %v391
        %v394 = vadd.f32 %v386, %v392
        %v395 = vadd.f32 %v387, %v392
        %v396 = vpack.c.bf16 %v395, %v394
        %v397 = vld [vmem:[#allocation4] sm:$0xf]
        %v398 = vld [vmem:[#allocation4 + $0x4] sm:$0xf]
        %v399 = vld [vmem:[#allocation4 + $0x8] sm:$0xf]
        %v400 = vld [vmem:[#allocation4 + $0xc] sm:$0xf]
        %v401 = vld [vmem:[%s4] sm:$0x1]
        %v403 = vlaneseq
        %v404 = vshrl.u32 %v403, 7
        %v405 = vsub.s32 0, %v404
        %v406 = vrot.slane %v401, %v405
        %v412 = vunpack.c.l.b16 %v397
        %v413 = vunpack.c.l.b16 %v398
        %v414 = vunpack.c.l.b16 %v399
        %v415 = vunpack.c.l.b16 %v400
        %v416 = vpack.c.b16 %v413, %v412
        %v417 = vpack.c.b16 %v415, %v414
        %v421 = vsel %vm352, %v396, 0
        %423 = vmatprep.subr.bf16.mxu0 0
        %424 = vmatpush1.bf16.msra.mxu0 %v416
        %425 = vmatprep.subr.bf16.mxu0 0
        %426 = vmatpush1.bf16.msra.mxu0 %v417
        %427 = vmatprep.subr.bf16.mxu0 0
        %428 = vmatpush1.bf16.msra.mxu0 0
        %429 = vmatprep.subr.bf16.mxu0 0
        %430 = vmatpush1.bf16.msra.mxu0 0
        %431 = vmatprep.subr.bf16.mxu0 0
        %432 = vmatpush1.bf16.msra.mxu0 0
        %433 = vmatprep.subr.bf16.mxu0 0
        %434 = vmatpush1.bf16.msra.mxu0 0
        %435 = vmatprep.subr.bf16.mxu0 0
        %436 = vmatpush1.bf16.msra.mxu0 0
        %437 = vmatprep.subr.bf16.mxu0 0
        %438 = vmatpush1.bf16.msra.mxu0 0
        %439 = vmatprep.subr.bf16.mxu0 0
        %440 = vmatpush1.bf16.msra.mxu0 0
        %441 = vmatprep.subr.bf16.mxu0 0
        %442 = vmatpush1.bf16.msra.mxu0 0
        %443 = vmatprep.subr.bf16.mxu0 0
        %444 = vmatpush1.bf16.msra.mxu0 0
        %445 = vmatprep.subr.bf16.mxu0 0
        %446 = vmatpush1.bf16.msra.mxu0 0
        %447 = vmatprep.subr.bf16.mxu0 0
        %448 = vmatpush1.bf16.msra.mxu0 0
        %449 = vmatprep.subr.bf16.mxu0 0
        %450 = vmatpush1.bf16.msra.mxu0 0
        %451 = vmatprep.subr.bf16.mxu0 0
        %452 = vmatpush1.bf16.msra.mxu0 0
        %453 = vmatprep.subr.bf16.mxu0 0
        %454 = vmatpush1.bf16.msra.mxu0 0
        %455 = vmatprep.mubr.bf16.mxu0 0
        %456 = vmatmul.mubr.bf16.gmra.mrb[0].mxu0 %v421
        %v457 = vpop.f32.mrb[0].mxu0
        %v458 = vadd.f32 %v406, %v457
        %v459 = vpop.f32.mrb[0].mxu0
        %v460 = vpop.f32.mrb[0].mxu0
        %v461 = vadd.f32 %v406, %v460
        %v462 = vpop.f32.mrb[0].mxu0
        %463 = vdwg.mxu0
        %v464 = vpack.c.bf16 %v461, %v458
        %v466 = vunpack.c.l.b16 %v464
        %v467 = vunpack.c.h.b16 %v464
        %v468 = vpack.c.b16 %v466, %v466
        %v469 = vpack.c.b16 %v467, %v467
        %vm472 = vcmask 60416
        %473 = vst.msk [vmem:[%s330] sm:$0xf] %vm472, %v468
        %474 = vst.msk [vmem:[%s330 + $0x4] sm:$0xf] %vm472, %v469
        %475 = vrot.lane.b32.xlu0 %v468, 120
        %v476 = vpop.permute.xlu0 %475
        %477 = vrot.lane.b32.xlu0 %v469, 120
        %v478 = vpop.permute.xlu0 %477
        %s481 = scalar_lea.vmem %s330, 8 [#allocation6]
        %482 = vst.msk [vmem:[%s481] sm:$0xf] %vm472, %v476
        %483 = vst.msk [vmem:[%s481 + $0x4] sm:$0xf] %vm472, %v478
        %484 = vrot.lane.b32.xlu0 %v468, 112
        %v485 = vpop.permute.xlu0 %484
        %486 = vrot.lane.b32.xlu0 %v469, 112
        %v487 = vpop.permute.xlu0 %486
        %s490 = scalar_lea.vmem %s330, 16 [#allocation6]
        %491 = vst.msk [vmem:[%s490] sm:$0xf] %vm472, %v485
        %492 = vst.msk [vmem:[%s490 + $0x4] sm:$0xf] %vm472, %v487
        %493 = vrot.lane.b32.xlu0 %v468, 104
        %v494 = vpop.permute.xlu0 %493
        %495 = vrot.lane.b32.xlu0 %v469, 104
        %v496 = vpop.permute.xlu0 %495
        %s499 = scalar_lea.vmem %s330, 24 [#allocation6]
        %500 = vst.msk [vmem:[%s499] sm:$0xf] %vm472, %v494
        %501 = vst.msk [vmem:[%s499 + $0x4] sm:$0xf] %vm472, %v496
        %502 = vrot.lane.b32.xlu0 %v468, 96
        %v503 = vpop.permute.xlu0 %502
        %504 = vrot.lane.b32.xlu0 %v469, 96
        %v505 = vpop.permute.xlu0 %504
        %508 = vst.msk [vmem:[%s336] sm:$0xf] %vm472, %v503
        %509 = vst.msk [vmem:[%s336 + $0x4] sm:$0xf] %vm472, %v505
        %510 = vrot.lane.b32.xlu0 %v468, 88
        %v511 = vpop.permute.xlu0 %510
        %512 = vrot.lane.b32.xlu0 %v469, 88
        %v513 = vpop.permute.xlu0 %512
        %s516 = scalar_lea.vmem %s336, 8 [#allocation7]
        %517 = vst.msk [vmem:[%s516] sm:$0xf] %vm472, %v511
        %518 = vst.msk [vmem:[%s516 + $0x4] sm:$0xf] %vm472, %v513
        %519 = vrot.lane.b32.xlu0 %v468, 80
        %v520 = vpop.permute.xlu0 %519
        %521 = vrot.lane.b32.xlu0 %v469, 80
        %v522 = vpop.permute.xlu0 %521
        %s525 = scalar_lea.vmem %s336, 16 [#allocation7]
        %526 = vst.msk [vmem:[%s525] sm:$0xf] %vm472, %v520
        %527 = vst.msk [vmem:[%s525 + $0x4] sm:$0xf] %vm472, %v522
        %528 = vrot.lane.b32.xlu0 %v468, 72
        %v529 = vpop.permute.xlu0 %528
        %530 = vrot.lane.b32.xlu0 %v469, 72
        %v531 = vpop.permute.xlu0 %530
        %s534 = scalar_lea.vmem %s336, 24 [#allocation7]
        %535 = vst.msk [vmem:[%s534] sm:$0xf] %vm472, %v529
        %536 = vst.msk [vmem:[%s534 + $0x4] sm:$0xf] %vm472, %v531
        %537 = vrot.lane.b32.xlu0 %v468, 64
        %v538 = vpop.permute.xlu0 %537
        %539 = vrot.lane.b32.xlu0 %v469, 64
        %v540 = vpop.permute.xlu0 %539
        %543 = vst.msk [vmem:[%s342] sm:$0xf] %vm472, %v538
        %544 = vst.msk [vmem:[%s342 + $0x4] sm:$0xf] %vm472, %v540
        %545 = vrot.lane.b32.xlu0 %v468, 56
        %v546 = vpop.permute.xlu0 %545
        %547 = vrot.lane.b32.xlu0 %v469, 56
        %v548 = vpop.permute.xlu0 %547
        %s551 = scalar_lea.vmem %s342, 8 [#allocation8]
        %552 = vst.msk [vmem:[%s551] sm:$0xf] %vm472, %v546
        %553 = vst.msk [vmem:[%s551 + $0x4] sm:$0xf] %vm472, %v548
        %554 = vrot.lane.b32.xlu0 %v468, 48
        %v555 = vpop.permute.xlu0 %554
        %556 = vrot.lane.b32.xlu0 %v469, 48
        %v557 = vpop.permute.xlu0 %556
        %s560 = scalar_lea.vmem %s342, 16 [#allocation8]
        %561 = vst.msk [vmem:[%s560] sm:$0xf] %vm472, %v555
        %562 = vst.msk [vmem:[%s560 + $0x4] sm:$0xf] %vm472, %v557
        %563 = vrot.lane.b32.xlu0 %v468, 40
        %v564 = vpop.permute.xlu0 %563
        %565 = vrot.lane.b32.xlu0 %v469, 40
        %v566 = vpop.permute.xlu0 %565
        %s569 = scalar_lea.vmem %s342, 24 [#allocation8]
        %570 = vst.msk [vmem:[%s569] sm:$0xf] %vm472, %v564
        %571 = vst.msk [vmem:[%s569 + $0x4] sm:$0xf] %vm472, %v566
        %s572 = sand.u32 %s157, 1
        %s573 = sand.u32 %s157, 1
        %s574 = smul.addr %s573, 32
        %s575 = scalar_lea.vmem [#allocation6], %s574
        %s576 = sand.u32 %s185, 1
        %s577 = sand.u32 %s185, 1
        %s578 = smul.addr %s577, 32
        %s579 = scalar_lea.vmem [#allocation7], %s578
        %s580 = sand.u32 %s213, 1
        %s581 = sand.u32 %s213, 1
        %s582 = smul.addr %s581, 32
        %s583 = scalar_lea.vmem [#allocation8], %s582
        // Predicated region
        $region49: #{tpu_custom_call.1} parent=39 // pred_check
          %p584 = pneg %p167
        $region50: #{tpu_custom_call.1} parent=39 // pred_check_branch
          %586 = sbr.rel (%p584) target = $region52
        $region51: #{tpu_custom_call.1} parent=39 // pred_region
          %s587 = smul.u32 2, %s28
          %s588 = smul.addr %s27, 16
          %s589 = sadd.s32 %s587, %s588
          %s590 = smul.addr %s589, 4
          %s591 = scalar_lea.vmem %s5, %s590
          // Predicated region
          $region53: #{tpu_custom_call.1} parent=51 // pred_check
            _
          $region54: #{tpu_custom_call.1} parent=51 // pred_check_branch
            %593 = sbr.rel (0) target = $region56
          $region55: #{tpu_custom_call.1} parent=51 // pred_region
            // Predicated region
            $region57: #{tpu_custom_call.1} parent=55 // pred_check
              _
            $region58: #{tpu_custom_call.1} parent=55 // pred_check_branch
              %595 = sbr.rel target = $region60
            $region59: #{tpu_custom_call.1} parent=55 // pred_region
              // Predicated region
              $region72: #{tpu_custom_call.1} parent=59 // pred_check
                _
              $region73: #{tpu_custom_call.1} parent=59 // pred_check_branch
                %624 = sbr.rel (0) target = $region75
              $region74: #{tpu_custom_call.1} parent=59 // pred_region
                loop: start=0, step=1, limit=1
                $region76: #{tpu_custom_call.1} parent=74 // loop_pre_header
                  _
                $region77: #{tpu_custom_call.1} parent=74 // loop_header
                  %s626 = sphi 0, %s630
                  %p627 = scmp.ge.s32.totalorder %s626, 1
                  %s631 = sphi %s575, %s575
                  %s632 = sphi %s591, %s591
                $region78: #{tpu_custom_call.1} parent=74 // loop_header_branch
                  %629 = sbr.rel (%p627) target = $region82
                $region79: #{tpu_custom_call.1} parent=74 // loop_body
                  _
                $region80: #{tpu_custom_call.1} parent=74 // loop_footer
                  %s630 = sadd.s32 1, %s626
                $region81: #{tpu_custom_call.1} parent=74 // loop_footer_branch
                  %625 = sbr.rel target = $region77
                $region82: #{tpu_custom_call.1} parent=74 // loop_exit
                  _
                loop: start=0, step=1, limit=1
                $region83: #{tpu_custom_call.1} parent=74 // loop_pre_header
                  _
                $region84: #{tpu_custom_call.1} parent=74 // loop_header
                  %s635 = sphi 0, %s639
                  %p636 = scmp.ge.s32.totalorder %s635, 1
                  %s640 = sphi %s575, %s575
                  %s641 = sphi %s591, %s591
                $region85: #{tpu_custom_call.1} parent=74 // loop_header_branch
                  %638 = sbr.rel (%p636) target = $region89
                $region86: #{tpu_custom_call.1} parent=74 // loop_body
                  %v642 = vld [vmem:[%s640] sm:$0xf]
                  %643 = vst [vmem:[%s641] sm:$0xf] %v642
                  %v644 = vld [vmem:[%s640 + $0x4] sm:$0xf]
                  %645 = vst [vmem:[%s641 + $0x4] sm:$0xf] %v644
                  %v646 = vld [vmem:[%s640 + $0x8] sm:$0xf]
                  %647 = vst [vmem:[%s641 + $0x10] sm:$0xf] %v646
                  %v648 = vld [vmem:[%s640 + $0xc] sm:$0xf]
                  %649 = vst [vmem:[%s641 + $0x14] sm:$0xf] %v648
                  %v650 = vld [vmem:[%s640 + $0x10] sm:$0xf]
                  %651 = vst [vmem:[%s641 + $0x20] sm:$0xf] %v650
                  %v652 = vld [vmem:[%s640 + $0x14] sm:$0xf]
                  %653 = vst [vmem:[%s641 + $0x24] sm:$0xf] %v652
                  %v654 = vld [vmem:[%s640 + $0x18] sm:$0xf]
                  %655 = vst [vmem:[%s641 + $0x30] sm:$0xf] %v654
                  %v656 = vld [vmem:[%s640 + $0x1c] sm:$0xf]
                  %657 = vst [vmem:[%s641 + $0x34] sm:$0xf] %v656
                $region87: #{tpu_custom_call.1} parent=74 // loop_footer
                  %s639 = sadd.s32 1, %s635
                $region88: #{tpu_custom_call.1} parent=74 // loop_footer_branch
                  %634 = sbr.rel target = $region84
                $region89: #{tpu_custom_call.1} parent=74 // loop_exit
                  _
              $region75: #{tpu_custom_call.1} parent=59 // pred_fallthru
                _
            $region60: #{tpu_custom_call.1} parent=55 // pred_fallthru
              _
            // Predicated region
            $region61: #{tpu_custom_call.1} parent=55 // pred_check
              _
            $region62: #{tpu_custom_call.1} parent=55 // pred_check_branch
              %597 = sbr.rel (0) target = $region64
            $region63: #{tpu_custom_call.1} parent=55 // pred_region
              loop: start=0, step=1, limit=1
              $region65: #{tpu_custom_call.1} parent=63 // loop_pre_header
                _
              $region66: #{tpu_custom_call.1} parent=63 // loop_header
                %s600 = sphi 0, %s604
                %p601 = scmp.ge.s32.totalorder %s600, 1
                %s605 = sphi %s575, %s575
                %s606 = sphi %s591, %s591
              $region67: #{tpu_custom_call.1} parent=63 // loop_header_branch
                %603 = sbr.rel (%p601) target = $region71
              $region68: #{tpu_custom_call.1} parent=63 // loop_body
                %v607 = vld [vmem:[%s605] sm:$0xf]
                %608 = vst [vmem:[%s606] sm:$0xf] %v607
                %v609 = vld [vmem:[%s605 + $0x4] sm:$0xf]
                %610 = vst [vmem:[%s606 + $0x4] sm:$0xf] %v609
                %v611 = vld [vmem:[%s605 + $0x8] sm:$0xf]
                %612 = vst [vmem:[%s606 + $0x10] sm:$0xf] %v611
                %v613 = vld [vmem:[%s605 + $0xc] sm:$0xf]
                %614 = vst [vmem:[%s606 + $0x14] sm:$0xf] %v613
                %v615 = vld [vmem:[%s605 + $0x10] sm:$0xf]
                %616 = vst [vmem:[%s606 + $0x20] sm:$0xf] %v615
                %v617 = vld [vmem:[%s605 + $0x14] sm:$0xf]
                %618 = vst [vmem:[%s606 + $0x24] sm:$0xf] %v617
                %v619 = vld [vmem:[%s605 + $0x18] sm:$0xf]
                %620 = vst [vmem:[%s606 + $0x30] sm:$0xf] %v619
                %v621 = vld [vmem:[%s605 + $0x1c] sm:$0xf]
                %622 = vst [vmem:[%s606 + $0x34] sm:$0xf] %v621
              $region69: #{tpu_custom_call.1} parent=63 // loop_footer
                %s604 = sadd.s32 1, %s600
              $region70: #{tpu_custom_call.1} parent=63 // loop_footer_branch
                %599 = sbr.rel target = $region66
              $region71: #{tpu_custom_call.1} parent=63 // loop_exit
                _
            $region64: #{tpu_custom_call.1} parent=55 // pred_fallthru
              _
          $region56: #{tpu_custom_call.1} parent=51 // pred_fallthru
            _
          %658 = vnop
        $region52: #{tpu_custom_call.1} parent=39 // pred_fallthru
          _
        // Predicated region
        $region90: #{tpu_custom_call.1} parent=39 // pred_check
          %p659 = pneg %p195
        $region91: #{tpu_custom_call.1} parent=39 // pred_check_branch
          %661 = sbr.rel (%p659) target = $region93
        $region92: #{tpu_custom_call.1} parent=39 // pred_region
          %s662 = smul.u32 2, %s28
          %s663 = smul.addr %s27, 16
          %s664 = sadd.s32 %s662, %s663
          %s665 = smul.addr %s664, 4
          %s666 = scalar_lea.vmem %s6, %s665
          // Predicated region
          $region94: #{tpu_custom_call.1} parent=92 // pred_check
            _
          $region95: #{tpu_custom_call.1} parent=92 // pred_check_branch
            %668 = sbr.rel (0) target = $region97
          $region96: #{tpu_custom_call.1} parent=92 // pred_region
            // Predicated region
            $region98: #{tpu_custom_call.1} parent=96 // pred_check
              _
            $region99: #{tpu_custom_call.1} parent=96 // pred_check_branch
              %670 = sbr.rel target = $region101
            $region100: #{tpu_custom_call.1} parent=96 // pred_region
              // Predicated region
              $region113: #{tpu_custom_call.1} parent=100 // pred_check
                _
              $region114: #{tpu_custom_call.1} parent=100 // pred_check_branch
                %699 = sbr.rel (0) target = $region116
              $region115: #{tpu_custom_call.1} parent=100 // pred_region
                loop: start=0, step=1, limit=1
                $region117: #{tpu_custom_call.1} parent=115 // loop_pre_header
                  _
                $region118: #{tpu_custom_call.1} parent=115 // loop_header
                  %s701 = sphi 0, %s705
                  %p702 = scmp.ge.s32.totalorder %s701, 1
                  %s706 = sphi %s579, %s579
                  %s707 = sphi %s666, %s666
                $region119: #{tpu_custom_call.1} parent=115 // loop_header_branch
                  %704 = sbr.rel (%p702) target = $region123
                $region120: #{tpu_custom_call.1} parent=115 // loop_body
                  _
                $region121: #{tpu_custom_call.1} parent=115 // loop_footer
                  %s705 = sadd.s32 1, %s701
                $region122: #{tpu_custom_call.1} parent=115 // loop_footer_branch
                  %700 = sbr.rel target = $region118
                $region123: #{tpu_custom_call.1} parent=115 // loop_exit
                  _
                loop: start=0, step=1, limit=1
                $region124: #{tpu_custom_call.1} parent=115 // loop_pre_header
                  _
                $region125: #{tpu_custom_call.1} parent=115 // loop_header
                  %s710 = sphi 0, %s714
                  %p711 = scmp.ge.s32.totalorder %s710, 1
                  %s715 = sphi %s579, %s579
                  %s716 = sphi %s666, %s666
                $region126: #{tpu_custom_call.1} parent=115 // loop_header_branch
                  %713 = sbr.rel (%p711) target = $region130
                $region127: #{tpu_custom_call.1} parent=115 // loop_body
                  %v717 = vld [vmem:[%s715] sm:$0xf]
                  %718 = vst [vmem:[%s716] sm:$0xf] %v717
                  %v719 = vld [vmem:[%s715 + $0x4] sm:$0xf]
                  %720 = vst [vmem:[%s716 + $0x4] sm:$0xf] %v719
                  %v721 = vld [vmem:[%s715 + $0x8] sm:$0xf]
                  %722 = vst [vmem:[%s716 + $0x10] sm:$0xf] %v721
                  %v723 = vld [vmem:[%s715 + $0xc] sm:$0xf]
                  %724 = vst [vmem:[%s716 + $0x14] sm:$0xf] %v723
                  %v725 = vld [vmem:[%s715 + $0x10] sm:$0xf]
                  %726 = vst [vmem:[%s716 + $0x20] sm:$0xf] %v725
                  %v727 = vld [vmem:[%s715 + $0x14] sm:$0xf]
                  %728 = vst [vmem:[%s716 + $0x24] sm:$0xf] %v727
                  %v729 = vld [vmem:[%s715 + $0x18] sm:$0xf]
                  %730 = vst [vmem:[%s716 + $0x30] sm:$0xf] %v729
                  %v731 = vld [vmem:[%s715 + $0x1c] sm:$0xf]
                  %732 = vst [vmem:[%s716 + $0x34] sm:$0xf] %v731
                $region128: #{tpu_custom_call.1} parent=115 // loop_footer
                  %s714 = sadd.s32 1, %s710
                $region129: #{tpu_custom_call.1} parent=115 // loop_footer_branch
                  %709 = sbr.rel target = $region125
                $region130: #{tpu_custom_call.1} parent=115 // loop_exit
                  _
              $region116: #{tpu_custom_call.1} parent=100 // pred_fallthru
                _
            $region101: #{tpu_custom_call.1} parent=96 // pred_fallthru
              _
            // Predicated region
            $region102: #{tpu_custom_call.1} parent=96 // pred_check
              _
            $region103: #{tpu_custom_call.1} parent=96 // pred_check_branch
              %672 = sbr.rel (0) target = $region105
            $region104: #{tpu_custom_call.1} parent=96 // pred_region
              loop: start=0, step=1, limit=1
              $region106: #{tpu_custom_call.1} parent=104 // loop_pre_header
                _
              $region107: #{tpu_custom_call.1} parent=104 // loop_header
                %s675 = sphi 0, %s679
                %p676 = scmp.ge.s32.totalorder %s675, 1
                %s680 = sphi %s579, %s579
                %s681 = sphi %s666, %s666
              $region108: #{tpu_custom_call.1} parent=104 // loop_header_branch
                %678 = sbr.rel (%p676) target = $region112
              $region109: #{tpu_custom_call.1} parent=104 // loop_body
                %v682 = vld [vmem:[%s680] sm:$0xf]
                %683 = vst [vmem:[%s681] sm:$0xf] %v682
                %v684 = vld [vmem:[%s680 + $0x4] sm:$0xf]
                %685 = vst [vmem:[%s681 + $0x4] sm:$0xf] %v684
                %v686 = vld [vmem:[%s680 + $0x8] sm:$0xf]
                %687 = vst [vmem:[%s681 + $0x10] sm:$0xf] %v686
                %v688 = vld [vmem:[%s680 + $0xc] sm:$0xf]
                %689 = vst [vmem:[%s681 + $0x14] sm:$0xf] %v688
                %v690 = vld [vmem:[%s680 + $0x10] sm:$0xf]
                %691 = vst [vmem:[%s681 + $0x20] sm:$0xf] %v690
                %v692 = vld [vmem:[%s680 + $0x14] sm:$0xf]
                %693 = vst [vmem:[%s681 + $0x24] sm:$0xf] %v692
                %v694 = vld [vmem:[%s680 + $0x18] sm:$0xf]
                %695 = vst [vmem:[%s681 + $0x30] sm:$0xf] %v694
                %v696 = vld [vmem:[%s680 + $0x1c] sm:$0xf]
                %697 = vst [vmem:[%s681 + $0x34] sm:$0xf] %v696
              $region110: #{tpu_custom_call.1} parent=104 // loop_footer
                %s679 = sadd.s32 1, %s675
              $region111: #{tpu_custom_call.1} parent=104 // loop_footer_branch
                %674 = sbr.rel target = $region107
              $region112: #{tpu_custom_call.1} parent=104 // loop_exit
                _
            $region105: #{tpu_custom_call.1} parent=96 // pred_fallthru
              _
          $region97: #{tpu_custom_call.1} parent=92 // pred_fallthru
            _
          %733 = vnop
        $region93: #{tpu_custom_call.1} parent=39 // pred_fallthru
          _
        // Predicated region
        $region131: #{tpu_custom_call.1} parent=39 // pred_check
          %p734 = pneg %p223
        $region132: #{tpu_custom_call.1} parent=39 // pred_check_branch
          %736 = sbr.rel (%p734) target = $region134
        $region133: #{tpu_custom_call.1} parent=39 // pred_region
          %s737 = smul.u32 2, %s28
          %s738 = smul.addr %s27, 16
          %s739 = sadd.s32 %s737, %s738
          %s740 = smul.addr %s739, 4
          %s741 = scalar_lea.vmem %s7, %s740
          // Predicated region
          $region135: #{tpu_custom_call.1} parent=133 // pred_check
            _
          $region136: #{tpu_custom_call.1} parent=133 // pred_check_branch
            %743 = sbr.rel (0) target = $region138
          $region137: #{tpu_custom_call.1} parent=133 // pred_region
            // Predicated region
            $region139: #{tpu_custom_call.1} parent=137 // pred_check
              _
            $region140: #{tpu_custom_call.1} parent=137 // pred_check_branch
              %745 = sbr.rel target = $region142
            $region141: #{tpu_custom_call.1} parent=137 // pred_region
              // Predicated region
              $region154: #{tpu_custom_call.1} parent=141 // pred_check
                _
              $region155: #{tpu_custom_call.1} parent=141 // pred_check_branch
                %774 = sbr.rel (0) target = $region157
              $region156: #{tpu_custom_call.1} parent=141 // pred_region
                loop: start=0, step=1, limit=1
                $region158: #{tpu_custom_call.1} parent=156 // loop_pre_header
                  _
                $region159: #{tpu_custom_call.1} parent=156 // loop_header
                  %s776 = sphi 0, %s780
                  %p777 = scmp.ge.s32.totalorder %s776, 1
                  %s781 = sphi %s583, %s583
                  %s782 = sphi %s741, %s741
                $region160: #{tpu_custom_call.1} parent=156 // loop_header_branch
                  %779 = sbr.rel (%p777) target = $region164
                $region161: #{tpu_custom_call.1} parent=156 // loop_body
                  _
                $region162: #{tpu_custom_call.1} parent=156 // loop_footer
                  %s780 = sadd.s32 1, %s776
                $region163: #{tpu_custom_call.1} parent=156 // loop_footer_branch
                  %775 = sbr.rel target = $region159
                $region164: #{tpu_custom_call.1} parent=156 // loop_exit
                  _
                loop: start=0, step=1, limit=1
                $region165: #{tpu_custom_call.1} parent=156 // loop_pre_header
                  _
                $region166: #{tpu_custom_call.1} parent=156 // loop_header
                  %s785 = sphi 0, %s789
                  %p786 = scmp.ge.s32.totalorder %s785, 1
                  %s790 = sphi %s583, %s583
                  %s791 = sphi %s741, %s741
                $region167: #{tpu_custom_call.1} parent=156 // loop_header_branch
                  %788 = sbr.rel (%p786) target = $region171
                $region168: #{tpu_custom_call.1} parent=156 // loop_body
                  %v792 = vld [vmem:[%s790] sm:$0xf]
                  %793 = vst [vmem:[%s791] sm:$0xf] %v792
                  %v794 = vld [vmem:[%s790 + $0x4] sm:$0xf]
                  %795 = vst [vmem:[%s791 + $0x4] sm:$0xf] %v794
                  %v796 = vld [vmem:[%s790 + $0x8] sm:$0xf]
                  %797 = vst [vmem:[%s791 + $0x10] sm:$0xf] %v796
                  %v798 = vld [vmem:[%s790 + $0xc] sm:$0xf]
                  %799 = vst [vmem:[%s791 + $0x14] sm:$0xf] %v798
                  %v800 = vld [vmem:[%s790 + $0x10] sm:$0xf]
                  %801 = vst [vmem:[%s791 + $0x20] sm:$0xf] %v800
                  %v802 = vld [vmem:[%s790 + $0x14] sm:$0xf]
                  %803 = vst [vmem:[%s791 + $0x24] sm:$0xf] %v802
                  %v804 = vld [vmem:[%s790 + $0x18] sm:$0xf]
                  %805 = vst [vmem:[%s791 + $0x30] sm:$0xf] %v804
                  %v806 = vld [vmem:[%s790 + $0x1c] sm:$0xf]
                  %807 = vst [vmem:[%s791 + $0x34] sm:$0xf] %v806
                $region169: #{tpu_custom_call.1} parent=156 // loop_footer
                  %s789 = sadd.s32 1, %s785
                $region170: #{tpu_custom_call.1} parent=156 // loop_footer_branch
                  %784 = sbr.rel target = $region166
                $region171: #{tpu_custom_call.1} parent=156 // loop_exit
                  _
              $region157: #{tpu_custom_call.1} parent=141 // pred_fallthru
                _
            $region142: #{tpu_custom_call.1} parent=137 // pred_fallthru
              _
            // Predicated region
            $region143: #{tpu_custom_call.1} parent=137 // pred_check
              _
            $region144: #{tpu_custom_call.1} parent=137 // pred_check_branch
              %747 = sbr.rel (0) target = $region146
            $region145: #{tpu_custom_call.1} parent=137 // pred_region
              loop: start=0, step=1, limit=1
              $region147: #{tpu_custom_call.1} parent=145 // loop_pre_header
                _
              $region148: #{tpu_custom_call.1} parent=145 // loop_header
                %s750 = sphi 0, %s754
                %p751 = scmp.ge.s32.totalorder %s750, 1
                %s755 = sphi %s583, %s583
                %s756 = sphi %s741, %s741
              $region149: #{tpu_custom_call.1} parent=145 // loop_header_branch
                %753 = sbr.rel (%p751) target = $region153
              $region150: #{tpu_custom_call.1} parent=145 // loop_body
                %v757 = vld [vmem:[%s755] sm:$0xf]
                %758 = vst [vmem:[%s756] sm:$0xf] %v757
                %v759 = vld [vmem:[%s755 + $0x4] sm:$0xf]
                %760 = vst [vmem:[%s756 + $0x4] sm:$0xf] %v759
                %v761 = vld [vmem:[%s755 + $0x8] sm:$0xf]
                %762 = vst [vmem:[%s756 + $0x10] sm:$0xf] %v761
                %v763 = vld [vmem:[%s755 + $0xc] sm:$0xf]
                %764 = vst [vmem:[%s756 + $0x14] sm:$0xf] %v763
                %v765 = vld [vmem:[%s755 + $0x10] sm:$0xf]
                %766 = vst [vmem:[%s756 + $0x20] sm:$0xf] %v765
                %v767 = vld [vmem:[%s755 + $0x14] sm:$0xf]
                %768 = vst [vmem:[%s756 + $0x24] sm:$0xf] %v767
                %v769 = vld [vmem:[%s755 + $0x18] sm:$0xf]
                %770 = vst [vmem:[%s756 + $0x30] sm:$0xf] %v769
                %v771 = vld [vmem:[%s755 + $0x1c] sm:$0xf]
                %772 = vst [vmem:[%s756 + $0x34] sm:$0xf] %v771
              $region151: #{tpu_custom_call.1} parent=145 // loop_footer
                %s754 = sadd.s32 1, %s750
              $region152: #{tpu_custom_call.1} parent=145 // loop_footer_branch
                %749 = sbr.rel target = $region148
              $region153: #{tpu_custom_call.1} parent=145 // loop_exit
                _
            $region146: #{tpu_custom_call.1} parent=137 // pred_fallthru
              _
          $region138: #{tpu_custom_call.1} parent=133 // pred_fallthru
            _
          %808 = vnop
        $region134: #{tpu_custom_call.1} parent=39 // pred_fallthru
          _
      $region40: #{tpu_custom_call.1} parent=5 // pred_fallthru
        _
      %p809 = scmp.le.s32.totalorder 2, %s18
      // Predicated region
      $region172: #{tpu_custom_call.1} parent=5 // pred_check
        %p810 = pneg %p809
      $region173: #{tpu_custom_call.1} parent=5 // pred_check_branch
        %812 = sbr.rel (%p810) target = $region175
      $region174: #{tpu_custom_call.1} parent=5 // pred_region
        %s813 = ssub.s32 %s18, 2
        // Predicated region
        $region176: #{tpu_custom_call.1} parent=174 // pred_check
          %p814 = pneg %p173
        $region177: #{tpu_custom_call.1} parent=174 // pred_check_branch
          %816 = sbr.rel (%p814) target = $region179
        $region178: #{tpu_custom_call.1} parent=174 // pred_region
          %s817 = sand.u32 %s158, 1
          %s818 = sand.u32 %s158, 1
          %s819 = smul.addr %s818, 32
          %s820 = scalar_lea.vmem [#allocation6], %s819
        $region179: #{tpu_custom_call.1} parent=174 // pred_fallthru
          _
        // Predicated region
        $region180: #{tpu_custom_call.1} parent=174 // pred_check
          %p821 = pneg %p201
        $region181: #{tpu_custom_call.1} parent=174 // pred_check_branch
          %823 = sbr.rel (%p821) target = $region183
        $region182: #{tpu_custom_call.1} parent=174 // pred_region
          %s824 = sand.u32 %s186, 1
          %s825 = sand.u32 %s186, 1
          %s826 = smul.addr %s825, 32
          %s827 = scalar_lea.vmem [#allocation7], %s826
        $region183: #{tpu_custom_call.1} parent=174 // pred_fallthru
          _
        // Predicated region
        $region184: #{tpu_custom_call.1} parent=174 // pred_check
          %p828 = pneg %p229
        $region185: #{tpu_custom_call.1} parent=174 // pred_check_branch
          %830 = sbr.rel (%p828) target = $region187
        $region186: #{tpu_custom_call.1} parent=174 // pred_region
          %s831 = sand.u32 %s214, 1
          %s832 = sand.u32 %s214, 1
          %s833 = smul.addr %s832, 32
          %s834 = scalar_lea.vmem [#allocation8], %s833
        $region187: #{tpu_custom_call.1} parent=174 // pred_fallthru
          _
      $region175: #{tpu_custom_call.1} parent=5 // pred_fallthru
        _
    $region6: #{tpu_custom_call.1} parent=1 // loop_footer
      %s22 = sadd.s32 1, %s18
    $region7: #{tpu_custom_call.1} parent=1 // loop_footer_branch
      %17 = sbr.rel target = $region3
    $region8: #{tpu_custom_call.1} parent=1 // loop_exit
      _
    %835 = vsyncpa [#allocation3], 1
    %s836 = scalar_lea.sflag [#allocation3], 1
    %837 = vsyncpa %s836, 1
    %838 = vsyncpa [#allocation5], 1

</llo_original>
